<compile_context>
chip_gen: v6e
topology: v6e:2x2x1
jax: 0.10.0
libtpu: 0.0.40
codegen_flags: <defaults>
</compile_context>

<pallas_src>
import jax
import jax.numpy as jnp
from jax.experimental import pallas as pl
from jax.experimental.pallas import tpu as pltpu


# ---------------------------------------------------------------------------
# Kernels
# ---------------------------------------------------------------------------
def _fullblock_kernel(w_ref, z_ref):
    """Per-batch path: w_ref (1, C, L), z_ref (1, 2C, 2L)."""
    _, C, L = w_ref.shape
    w = w_ref[...]
    z_ref[:, 0:C,     0:L    ] = w
    z_ref[:, 0:C,     L:2 * L] = w
    z_ref[:, C:2 * C, 0:L    ] = w
    z_ref[:, C:2 * C, L:2 * L] = w


def _ch_tiled_kernel(w_ref, z_ref):
    """Channel-tiled path: w_ref (1, c_blk, L), z_ref (1, 2, c_blk, 2L).

    L is a multiple of 128, so both stores below are aligned, unmasked,
    lane-dense slabs (no vst.msk partial stores).
    """
    L = w_ref.shape[-1]
    w = w_ref[...]                                           # (1, c_blk, L)
    w2 = jnp.broadcast_to(w[:, None, :, :], (1, 2) + w.shape[1:])
    z_ref[:, :, :, 0:L    ] = w2
    z_ref[:, :, :, L:2 * L] = w2


def _general_tiled_kernel(w_ref, z_ref):
    """General fallback: w_ref (1, c_blk, l_blk), z_ref (1, 2, c_blk, 2, l_blk)."""
    w = w_ref[...]
    z_ref[...] = jnp.broadcast_to(w[:, None, :, None, :], z_ref.shape)


# ---------------------------------------------------------------------------
# Sizing helpers
# ---------------------------------------------------------------------------
def _sublane_multiple(dtype):
    # f32 -> 8, bf16 -> 16, int8/fp8 -> 32 (sub-32-bit packs along sublanes).
    itemsize = jnp.dtype(dtype).itemsize
    return 8 * max(1, 4 // itemsize)


def _vmem_budgets():
    """Return (vmem_limit_bytes, pipeline_buffer_budget_bytes), per generation.

    pipeline budget covers 2x double-buffered input blocks + 2x double-buffered
    output blocks (~10x one input block for this 4x-replication kernel).
    """
    cap = None
    try:
        cap = int(getattr(pltpu.get_tpu_info(), "vmem_capacity_bytes", 0)) or None
    except Exception:
        cap = None
    if cap is None:
        try:
            kind = jax.devices()[0].device_kind.lower()
            if "v5" in kind or "v6" in kind:
                cap = 128 * 1024 * 1024
        except Exception:
            cap = None
    if cap is not None and cap >= 100 * 1024 * 1024:
        # v5e / v6e: 128 MiB physical VMEM -> large streaming blocks.
        return 96 * 1024 * 1024, 80 * 1024 * 1024
    # v7x-class (64 MiB physical VMEM) or unknown part: stay conservative.
    return 48 * 1024 * 1024, 40 * 1024 * 1024


def _largest_tile(dim, unit, bytes_per_elem, budget_bytes):
    """Largest multiple of `unit` that (a) does not exceed dim rounded down to
    `unit`, (b) fits the byte budget; minimum `unit`.  Full dim if dim <= unit."""
    if dim <= unit:
        return int(dim)
    cap = (dim // unit) * unit
    fit = (budget_bytes // max(1, bytes_per_elem)) // unit * unit
    return int(max(unit, min(cap, fit)))


# ---------------------------------------------------------------------------
# pallas_call wrappers (three paths)
# ---------------------------------------------------------------------------
def _cat_per_batch(w, vmem_limit):
    """grid=(B,): whole per-batch output written as one contiguous block."""
    B, C, L = w.shape
    return pl.pallas_call(
        _fullblock_kernel,
        out_shape=jax.ShapeDtypeStruct((B, 2 * C, 2 * L), w.dtype),
        grid=(B,),
        in_specs=[pl.BlockSpec((1, C, L), lambda b: (b, 0, 0))],
        out_specs=pl.BlockSpec((1, 2 * C, 2 * L), lambda b: (b, 0, 0)),
        compiler_params=pltpu.CompilerParams(
            dimension_semantics=("parallel",),
            vmem_limit_bytes=vmem_limit,
        ),
    )(w)


def _cat_channel_tiled(w, sub, itemsize, pipe_budget, vmem_limit):
    """grid=(B, nc): output (B, 2, C, 2L), lane-dense 2L rows, ragged C ok."""
    B, C, L = w.shape
    # cost per channel row: in (L) + out (4L), double-buffered -> 10*L*itemsize
    c_blk = _largest_tile(C, sub, 10 * L * itemsize, pipe_budget)
    nc = pl.cdiv(C, c_blk)
    out4 = pl.pallas_call(
        _ch_tiled_kernel,
        out_shape=jax.ShapeDtypeStruct((B, 2, C, 2 * L), w.dtype),
        grid=(B, nc),
        in_specs=[pl.BlockSpec((1, c_blk, L), lambda b, ci: (b, ci, 0))],
        out_specs=pl.BlockSpec((1, 2, c_blk, 2 * L), lambda b, ci: (b, 0, ci, 0)),
        compiler_params=pltpu.CompilerParams(
            dimension_semantics=("parallel", "parallel"),
            vmem_limit_bytes=vmem_limit,
        ),
    )(w)
    # (B, 2, C, 2L) -> (B, 2C, 2L) is a contiguous (free) reshape.
    return out4.reshape(B, 2 * C, 2 * L)


def _cat_general_tiled(w, sub, itemsize, pipe_budget, vmem_limit):
    """grid=(B, nc, nl): output (B, 2, C, 2, L); handles unaligned / huge L."""
    B, C, L = w.shape
    min_c = min(C, sub)
    l_blk = _largest_tile(L, 128, 10 * min_c * itemsize, pipe_budget)
    c_blk = _largest_tile(C, sub, 10 * l_blk * itemsize, pipe_budget)
    nc = pl.cdiv(C, c_blk)
    nl = pl.cdiv(L, l_blk)
    out5 = pl.pallas_call(
        _general_tiled_kernel,
        out_shape=jax.ShapeDtypeStruct((B, 2, C, 2, L), w.dtype),
        grid=(B, nc, nl),
        in_specs=[pl.BlockSpec((1, c_blk, l_blk), lambda b, ci, lj: (b, ci, lj))],
        out_specs=pl.BlockSpec((1, 2, c_blk, 2, l_blk),
                               lambda b, ci, lj: (b, 0, ci, 0, lj)),
        compiler_params=pltpu.CompilerParams(
            dimension_semantics=("parallel", "parallel", "parallel"),
            vmem_limit_bytes=vmem_limit,
        ),
    )(w)
    # (B, 2, C, 2, L) -> (B, 2C, 2L) is a contiguous (free) reshape.
    return out5.reshape(B, 2 * C, 2 * L)


# ---------------------------------------------------------------------------
# Public entry point
# ---------------------------------------------------------------------------
def not_merged_consecutive_cat_net2(w, *, pipeline_budget_bytes=None):
    """z = cat([cat([w, w], dim=2), cat([w, w], dim=2)], dim=1)."""
    B, C, L = w.shape
    itemsize = jnp.dtype(w.dtype).itemsize
    sub = _sublane_multiple(w.dtype)
    vmem_limit, pipe_budget = _vmem_budgets()
    if pipeline_budget_bytes is not None:          # testing / tuning override
        pipe_budget = int(pipeline_budget_bytes)

    # Path 1: whole per-batch output resident -> one contiguous HBM writeback.
    if 10 * C * L * itemsize <= pipe_budget:
        return _cat_per_batch(w, vmem_limit)

    # Path 2: channel-tiled, lane-dense 2L writeback (needs L % 128 == 0 and
    # a minimal sublane-sized channel block to fit the budget).
    if L % 128 == 0 and 10 * min(C, sub) * L * itemsize <= pipe_budget:
        return _cat_channel_tiled(w, sub, itemsize, pipe_budget, vmem_limit)

    # Path 3: general tiled fallback (unaligned L, ragged C, or huge L).
    return _cat_general_tiled(w, sub, itemsize, pipe_budget, vmem_limit)


def _reference(w):
    x = jnp.concatenate([w, w], axis=2)
    y = jnp.concatenate([w, w], axis=2)
    return jnp.concatenate([x, y], axis=1)


# ---------------------------------------------------------------------------
# Main
# ---------------------------------------------------------------------------
if __name__ == "__main__":
    key = jax.random.PRNGKey(0)
    k1, k2, k3, k4 = jax.random.split(key, 4)

    # 1) The module's own example shape (1, 2, 3) -> per-batch full-block path.
    w0 = jax.random.normal(k1, (1, 2, 3), dtype=jnp.float32)
    z0 = jax.block_until_ready(not_merged_consecutive_cat_net2(w0))
    assert z0.shape == (1, 4, 6), z0.shape
    assert z0.dtype == w0.dtype
    assert jnp.array_equal(z0, _reference(w0)), "per-batch (unaligned) mismatch"

    # 2) Small aligned shape -> still the per-batch contiguous-writeback path.
    w1 = jax.random.normal(k2, (2, 16, 256), dtype=jnp.float32)
    z1 = jax.block_until_ready(not_merged_consecutive_cat_net2(w1))
    assert z1.shape == (2, 32, 512), z1.shape
    assert jnp.array_equal(z1, _reference(w1)), "per-batch (aligned) mismatch"

    # 3) Force the channel-tiled lane-dense path with a tiny pipeline budget.
    w2 = jax.random.normal(k3, (2, 32, 256), dtype=jnp.float32)
    z2 = jax.block_until_ready(
        not_merged_consecutive_cat_net2(w2, pipeline_budget_bytes=128 * 1024))
    assert z2.shape == (2, 64, 512), z2.shape
    assert jnp.array_equal(z2, _reference(w2)), "channel-tiled mismatch"

    # 4) Force the general path (L % 128 != 0, ragged C and L tiles).
    w3 = jax.random.normal(k4, (2, 32, 192), dtype=jnp.float32)
    z3 = jax.block_until_ready(
        not_merged_consecutive_cat_net2(w3, pipeline_budget_bytes=128 * 1024))
    assert z3.shape == (2, 64, 384), z3.shape
    assert jnp.array_equal(z3, _reference(w3)), "general-tiled mismatch"

    print("KERNEL_OK")
</pallas_src>

<mosaic_0001>
module attributes {stable_mosaic.version = 11 : i64} {
  func.func @_fullblock_kernel(%arg0: i32, %arg1: memref<1x2x3xf32, #tpu.memory_space<vmem>>, %arg2: memref<1x4x6xf32, #tpu.memory_space<vmem>>) attributes {dimension_semantics = [#tpu.dimension_semantics<parallel>], iteration_bounds = array<i64: 1>, scalar_prefetch = 0 : i64, scratch_operands = 0 : i64, tpu.core_type = #tpu.core_type<tc>, window_params = [{transform_indices = @transform_0, window_bounds = array<i64: 1, 2, 3>}, {transform_indices = @transform_1, window_bounds = array<i64: 1, 4, 6>}]} {
    %c0 = arith.constant 0 : index
    %c0_0 = arith.constant 0 : index
    %c0_1 = arith.constant 0 : index
    %0 = vector.load %arg1[%c0, %c0_0, %c0_1] : memref<1x2x3xf32, #tpu.memory_space<vmem>>, vector<1x2x3xf32>
    %c0_2 = arith.constant 0 : index
    %c0_3 = arith.constant 0 : index
    %c0_4 = arith.constant 0 : index
    %1 = vector.load %arg2[%c0_2, %c0_3, %c0_4] : memref<1x4x6xf32, #tpu.memory_space<vmem>>, vector<1x2x3xf32>
    tpu.vector_store %arg2[%c0_2, %c0_3, %c0_4], %0 {strides = array<i32>} : memref<1x4x6xf32, #tpu.memory_space<vmem>>, vector<1x2x3xf32>,
    %c0_5 = arith.constant 0 : index
    %c0_6 = arith.constant 0 : index
    %c3 = arith.constant 3 : index
    %2 = vector.load %arg2[%c0_5, %c0_6, %c3] : memref<1x4x6xf32, #tpu.memory_space<vmem>>, vector<1x2x3xf32>
    tpu.vector_store %arg2[%c0_5, %c0_6, %c3], %0 {strides = array<i32>} : memref<1x4x6xf32, #tpu.memory_space<vmem>>, vector<1x2x3xf32>,
    %c0_7 = arith.constant 0 : index
    %c2 = arith.constant 2 : index
    %c0_8 = arith.constant 0 : index
    %3 = vector.load %arg2[%c0_7, %c2, %c0_8] : memref<1x4x6xf32, #tpu.memory_space<vmem>>, vector<1x2x3xf32>
    tpu.vector_store %arg2[%c0_7, %c2, %c0_8], %0 {strides = array<i32>} : memref<1x4x6xf32, #tpu.memory_space<vmem>>, vector<1x2x3xf32>,
    %c0_9 = arith.constant 0 : index
    %c2_10 = arith.constant 2 : index
    %c3_11 = arith.constant 3 : index
    %4 = vector.load %arg2[%c0_9, %c2_10, %c3_11] : memref<1x4x6xf32, #tpu.memory_space<vmem>>, vector<1x2x3xf32>
    tpu.vector_store %arg2[%c0_9, %c2_10, %c3_11], %0 {strides = array<i32>} : memref<1x4x6xf32, #tpu.memory_space<vmem>>, vector<1x2x3xf32>,
    return
  }
  func.func @transform_0(%arg0: i32) -> (i32, i32, i32) {
    %c0_i32 = arith.constant 0 : i32
    %c0_i32_0 = arith.constant 0 : i32
    %c0_i32_1 = arith.constant 0 : i32
    return %arg0, %c0_i32, %c0_i32_0 : i32, i32, i32
  }
  func.func @transform_1(%arg0: i32) -> (i32, i32, i32) {
    %c0_i32 = arith.constant 0 : i32
    %c0_i32_0 = arith.constant 0 : i32
    %c0_i32_1 = arith.constant 0 : i32
    return %arg0, %c0_i32, %c0_i32_0 : i32, i32, i32
  }
}

</mosaic_0001>

<llo_original>
// kernel: tpu_custom_call.1
$region0: #{tpu_custom_call.1}
  #allocation0 [shape = 'u32[]', space=smem, size = 0x4, offset = 0x4, fixed_abs, tag = 'smem constant byte address 0x4 - core index']
  #allocation1 [shape = 'u32[144,128]{1,0:T(1,128)}', space=vmem, size = 0x12000, scoped, tag = 'internal scratch']
  %s0 = inlined_call_operand.hbm [shape: f32[1,2,3], index: 0, kind: input, shape index: {}]
  %s1 = inlined_call_operand.hbm [shape: f32[1,4,6], index: 1, kind: output, shape index: {}]
  %s2 = sld [smem:[#allocation0]]
  $region18: #{tpu_custom_call.1} parent=0
    _
  %s4 = ssub.s32 1, %s2
  %s5 = scalar_select 0, %s4, %s2
  $region1: #{tpu_custom_call.1} parent=0
    #allocation2 [shape = 'u8[1024]{0}', space=vmem, size = 0x400, scoped, tag = 'input window, operand 0, single buffered']
    #allocation3 [shape = 's32[1]{0}', space=sflag, size = 0x4, scoped, tag = 'scoped memory for tpu_custom_call.1']
    #allocation4 [shape = 's32[1]{0}', space=sflag, size = 0x4, scoped, tag = 'scoped memory for tpu_custom_call.1']
    #allocation5 [shape = 'u8[2048]{0}', space=vmem, size = 0x800, scoped, tag = 'output window, operand 0, single buffered']
    %6 = vsyncpa [#allocation3], 0
    %7 = vsyncpa [#allocation4], 0
    // Predicated region
    $region2: #{tpu_custom_call.1} parent=1 // pred_check
      _
    $region3: #{tpu_custom_call.1} parent=1 // pred_check_branch
      %9 = sbr.rel (0) target = $region5
    $region4: #{tpu_custom_call.1} parent=1 // pred_region
      %s11 = ssub.s32 32, 32
      %12 = vsyncadd [#allocation3], %s11
      %s14 = sshll.u32 [#allocation2], 4
      %s15 = int_to_ptr.vmem [resolvable:$true] %s14
      %17 = dma.hbm_to_vmem [thread:$0]  %s0, 32, %s15, [#allocation3]
    $region5: #{tpu_custom_call.1} parent=1 // pred_fallthru
      _
    // Predicated region
    $region6: #{tpu_custom_call.1} parent=1 // pred_check
      _
    $region7: #{tpu_custom_call.1} parent=1 // pred_check_branch
      %19 = sbr.rel (0) target = $region9
    $region8: #{tpu_custom_call.1} parent=1 // pred_region
      %20 = dma.done [#allocation3], 32
    $region9: #{tpu_custom_call.1} parent=1 // pred_fallthru
      _
    %v21 = vld [vmem:[#allocation2] sm:$0x3]
    %vm22 = vcmask 17408
    %23 = vst.msk [vmem:[#allocation5] sm:$0x3] %vm22, %v21
    %25 = vrot.lane.b32.xlu0 %v21, 3
    %v26 = vpop.permute.xlu0 %25
    %vm28 = vcmask 42008
    %29 = vst.msk [vmem:[#allocation5] sm:$0x3] %vm28, %v26
    %30 = vst.msk [vmem:[#allocation5 + $0x2] sm:$0x3] %vm22, %v21
    %31 = vst.msk [vmem:[#allocation5 + $0x2] sm:$0x3] %vm28, %v26
    // Predicated region
    $region10: #{tpu_custom_call.1} parent=1 // pred_check
      _
    $region11: #{tpu_custom_call.1} parent=1 // pred_check_branch
      %33 = sbr.rel (0) target = $region13
    $region12: #{tpu_custom_call.1} parent=1 // pred_region
      %s35 = ssub.s32 64, 64
      %36 = vsyncadd [#allocation4], %s35
      %s38 = sshll.u32 [#allocation5], 4
      %s39 = int_to_ptr.vmem [resolvable:$true] %s38
      %41 = dma.vmem_to_hbm [thread:$0]  %s39, 64, %s1, [#allocation4]
    $region13: #{tpu_custom_call.1} parent=1 // pred_fallthru
      _
    // Predicated region
    $region14: #{tpu_custom_call.1} parent=1 // pred_check
      _
    $region15: #{tpu_custom_call.1} parent=1 // pred_check_branch
      %43 = sbr.rel (0) target = $region17
    $region16: #{tpu_custom_call.1} parent=1 // pred_region
      %44 = dma.done [#allocation4], 64
    $region17: #{tpu_custom_call.1} parent=1 // pred_fallthru
      _
    %45 = vsyncpa [#allocation3], 1
    %46 = vsyncpa [#allocation4], 1

</llo_original>
